<compile_context>
chip_gen: v5e
topology: v5e:2x2
jax: 0.10.0
libtpu: 0.0.40
codegen_flags: <defaults>
</compile_context>

<pallas_src>
import jax
import jax.numpy as jnp
from jax.experimental import pallas as pl
from jax.experimental.pallas import tpu as pltpu

_COL_CANDIDATES = (2048, 1024, 512, 256, 128)


def _affine_kernel(x_ref, o_ref):
    x = x_ref[...]
    # ((x + 2) * 3 - 5) / 2  ==  1.5 * x + 0.5   (single fused multiply-add)
    o_ref[...] = (x * 1.5 + 0.5).astype(o_ref.dtype)


def pt_module_forward(x, *, target_block_bytes=2 * 1024 * 1024):
    """Pallas implementation of PtModule.forward: ((x + 2) * 3 - 5) / 2."""
    orig_shape = x.shape
    orig_dtype = x.dtype
    n = int(x.size)
    if n == 0:
        return x

    flat = x.reshape(-1)
    itemsize = jnp.dtype(orig_dtype).itemsize

    # Widest lane-dense column count that divides n exactly (no padding needed).
    cols = None
    for c in _COL_CANDIDATES:
        if n % c == 0:
            cols = c
            break

    # ---------- Small-input fast path: one full-array block, no grid. ----------
    if n * itemsize <= (1 << 20):
        x2d = flat.reshape(n // cols, cols) if cols is not None else flat.reshape(1, n)
        out2d = pl.pallas_call(
            _affine_kernel,
            out_shape=jax.ShapeDtypeStruct(x2d.shape, orig_dtype),
        )(x2d)
        return out2d.reshape(orig_shape)

    # ---------- Large-input path: tiled, lane-dense, multi-MiB blocks. ----------
    padded_n = n
    if cols is None:
        # Nothing divides n: pad a single partial row up to a multiple of 128.
        cols = 128
        pad = (-n) % cols
        flat = jnp.pad(flat, (0, pad))
        padded_n = n + pad

    rows = padded_n // cols
    x2d = flat.reshape(rows, cols)

    # Block of ~target_block_bytes; second-last dim a multiple of 8 (sublane).
    tile_rows = max(8, (target_block_bytes // (cols * itemsize)) // 8 * 8)
    if tile_rows >= rows:
        tile_rows = rows  # full extent along rows -> single grid step, always legal

    grid = (pl.cdiv(rows, tile_rows),)
    out2d = pl.pallas_call(
        _affine_kernel,
        out_shape=jax.ShapeDtypeStruct((rows, cols), orig_dtype),
        grid_spec=pltpu.PrefetchScalarGridSpec(
            num_scalar_prefetch=0,
            grid=grid,
            in_specs=[pl.BlockSpec((tile_rows, cols), lambda i: (i, 0))],
            out_specs=pl.BlockSpec((tile_rows, cols), lambda i: (i, 0)),
        ),
        compiler_params=pltpu.CompilerParams(
            dimension_semantics=("parallel",),
        ),
    )(x2d)

    out_flat = out2d.reshape(-1)
    if padded_n != n:
        out_flat = out_flat[:n]
    return out_flat.reshape(orig_shape)


def _ref_forward(x):
    y = x + 2.0
    z = y * 3.0
    t = z - 5.0
    return t / 2.0


if __name__ == "__main__":
    key = jax.random.PRNGKey(0)

    # Primary small test, consistent with an NCHW activation: batch=2, channels=4, 16x16.
    x_small = jax.random.normal(key, (2, 4, 16, 16), dtype=jnp.float32)
    out_small = jax.block_until_ready(pt_module_forward(x_small))
    ref_small = _ref_forward(x_small)
    assert out_small.shape == x_small.shape and out_small.dtype == x_small.dtype
    assert jnp.allclose(out_small, ref_small, atol=1e-5, rtol=1e-5)

    # Medium test to exercise the tiled (multi-block, lane-dense) path.
    x_med = jax.random.normal(jax.random.PRNGKey(1), (4, 8, 256, 128), dtype=jnp.float32)
    out_med = jax.block_until_ready(pt_module_forward(x_med))
    ref_med = _ref_forward(x_med)
    assert out_med.shape == x_med.shape and out_med.dtype == x_med.dtype
    assert jnp.allclose(out_med, ref_med, atol=1e-5, rtol=1e-5)

    print("KERNEL_OK")
</pallas_src>

<mosaic_0001>
module attributes {stable_mosaic.version = 11 : i64} {
  func.func @_affine_kernel(%arg0: memref<1x2048xf32, #tpu.memory_space<vmem>>, %arg1: memref<1x2048xf32, #tpu.memory_space<vmem>>) attributes {dimension_semantics = [], scalar_prefetch = 0 : i64, scratch_operands = 0 : i64, tpu.core_type = #tpu.core_type<tc>} {
    %c0 = arith.constant 0 : index
    %c0_0 = arith.constant 0 : index
    %0 = vector.load %arg0[%c0, %c0_0] : memref<1x2048xf32, #tpu.memory_space<vmem>>, vector<1x2048xf32>
    %cst = arith.constant 1.500000e+00 : f32
    %1 = vector.broadcast %cst : f32 to vector<1x2048xf32>
    %2 = arith.mulf %0, %1 : vector<1x2048xf32>
    %cst_1 = arith.constant 5.000000e-01 : f32
    %3 = vector.broadcast %cst_1 : f32 to vector<1x2048xf32>
    %4 = arith.addf %2, %3 : vector<1x2048xf32>
    %c0_2 = arith.constant 0 : index
    %c0_3 = arith.constant 0 : index
    %5 = vector.load %arg1[%c0_2, %c0_3] : memref<1x2048xf32, #tpu.memory_space<vmem>>, vector<1x2048xf32>
    tpu.vector_store %arg1[%c0_2, %c0_3], %4 {strides = array<i32>} : memref<1x2048xf32, #tpu.memory_space<vmem>>, vector<1x2048xf32>,
    return
  }
}

</mosaic_0001>

<llo_original>
// kernel: tpu_custom_call.1
$region0: #{tpu_custom_call.1}
  #allocation0 [shape = 'u32[]', space=smem, size = 0x4, offset = 0x4, fixed_abs, tag = 'smem constant byte address 0x4 - core index']
  #allocation1 [shape = 'u32[72,128]{1,0:T(1,128)}', space=vmem, size = 0x9000, scoped, tag = 'internal scratch']
  %s0 = inlined_call_operand.hbm [shape: f32[1,2048], index: 0, kind: input, shape index: {}]
  %s1 = inlined_call_operand.hbm [shape: f32[1,2048], index: 1, kind: output, shape index: {}]
  %s2 = sld [smem:[#allocation0]]
  $region18: #{tpu_custom_call.1} parent=0
    _
  %s4 = ssub.s32 1, %s2
  %s5 = scalar_select 0, %s4, %s2
  $region1: #{tpu_custom_call.1} parent=0
    #allocation2 [shape = 'u8[8192]{0}', space=vmem, size = 0x2000, scoped, tag = 'input window, operand 0, single buffered']
    #allocation3 [shape = 's32[1]{0}', space=sflag, size = 0x4, scoped, tag = 'scoped memory for tpu_custom_call.1']
    #allocation4 [shape = 's32[1]{0}', space=sflag, size = 0x4, scoped, tag = 'scoped memory for tpu_custom_call.1']
    #allocation5 [shape = 'u8[8192]{0}', space=vmem, size = 0x2000, scoped, tag = 'output window, operand 0, single buffered']
    %6 = vsyncpa [#allocation3], 0
    %7 = vsyncpa [#allocation4], 0
    // Predicated region
    $region2: #{tpu_custom_call.1} parent=1 // pred_check
      _
    $region3: #{tpu_custom_call.1} parent=1 // pred_check_branch
      %9 = sbr.rel (0) target = $region5
    $region4: #{tpu_custom_call.1} parent=1 // pred_region
      %11 = vsyncadd [#allocation3], 0
      %s13 = sshll.u32 %s0, 4
      %s14 = int_to_ptr.hbm [resolvable:$true] %s13
      %s15 = sshll.u32 [#allocation2], 4
      %s16 = int_to_ptr.vmem [resolvable:$true] %s15
      %18 = dma.hbm_to_vmem [thread:$0]  %s14, 256, %s16, [#allocation3]
    $region5: #{tpu_custom_call.1} parent=1 // pred_fallthru
      _
    // Predicated region
    $region6: #{tpu_custom_call.1} parent=1 // pred_check
      _
    $region7: #{tpu_custom_call.1} parent=1 // pred_check_branch
      %20 = sbr.rel (0) target = $region9
    $region8: #{tpu_custom_call.1} parent=1 // pred_region
      %22 = dma.done [#allocation3], 256
    $region9: #{tpu_custom_call.1} parent=1 // pred_fallthru
      _
    %v23 = vld [vmem:[#allocation2] sm:$0xff]
    %v24 = vld [vmem:[#allocation2 + $0x8] sm:$0xff]
    %v25 = vmul.f32 %v23, 1.5
    %v26 = vmul.f32 %v24, 1.5
    %v27 = vadd.f32 %v25, 0.5
    %v28 = vadd.f32 %v26, 0.5
    %29 = vst [vmem:[#allocation5] sm:$0xff] %v27
    %30 = vst [vmem:[#allocation5 + $0x8] sm:$0xff] %v28
    // Predicated region
    $region10: #{tpu_custom_call.1} parent=1 // pred_check
      _
    $region11: #{tpu_custom_call.1} parent=1 // pred_check_branch
      %32 = sbr.rel (0) target = $region13
    $region12: #{tpu_custom_call.1} parent=1 // pred_region
      %34 = vsyncadd [#allocation4], 0
      %s36 = sshll.u32 [#allocation5], 4
      %s37 = int_to_ptr.vmem [resolvable:$true] %s36
      %s38 = sshll.u32 %s1, 4
      %s39 = int_to_ptr.hbm [resolvable:$true] %s38
      %41 = dma.vmem_to_hbm [thread:$0]  %s37, 256, %s39, [#allocation4]
    $region13: #{tpu_custom_call.1} parent=1 // pred_fallthru
      _
    // Predicated region
    $region14: #{tpu_custom_call.1} parent=1 // pred_check
      _
    $region15: #{tpu_custom_call.1} parent=1 // pred_check_branch
      %43 = sbr.rel (0) target = $region17
    $region16: #{tpu_custom_call.1} parent=1 // pred_region
      %45 = dma.done [#allocation4], 256
    $region17: #{tpu_custom_call.1} parent=1 // pred_fallthru
      _
    %46 = vsyncpa [#allocation3], 1
    %47 = vsyncpa [#allocation4], 1

</llo_original>
